<compile_context>
chip_gen: v7x
topology: tpu7x:2x2x1
jax: 0.10.0
libtpu: 0.0.40
codegen_flags: <defaults>
</compile_context>

<pallas_src>
import functools

import jax
import jax.numpy as jnp
from jax import lax
from jax.experimental import pallas as pl
from jax.experimental.pallas import tpu as pltpu


_INV_SQRT2 = 0.7071067811865476  # 1/sqrt(2) for exact (erf) GELU


def _round_up(a: int, b: int) -> int:
    return ((a + b - 1) // b) * b


def _cdiv(a: int, b: int) -> int:
    return -(-a // b)


def _min_sublane(dtype) -> int:
    # Native sublane packing: 8 rows for 4-byte, 16 for 2-byte, 32 for 1-byte dtypes.
    return {4: 8, 2: 16, 1: 32}.get(jnp.dtype(dtype).itemsize, 8)


def _supports_single_buffer() -> bool:
    try:
        pl.BlockSpec((8, 128), lambda i: (0, 0), pipeline_mode=pl.Buffered(1))
        return True
    except Exception:
        return False


_SINGLE_BUFFER_OK = _supports_single_buffer()


def _const_spec(block_shape, index_map):
    """BlockSpec for an operand whose block never changes across the grid.

    Single-buffered when supported: Pallas double-buffers every operand by
    default, which wastes a full extra VMEM copy of W1 / W2.
    """
    if _SINGLE_BUFFER_OK:
        return pl.BlockSpec(block_shape, index_map, pipeline_mode=pl.Buffered(1))
    return pl.BlockSpec(block_shape, index_map)


def _vmem_budget_bytes() -> int:
    """Generation-aware VMEM limit (leave headroom for Mosaic internals)."""
    try:
        cap = int(pltpu.get_tpu_info().vmem_capacity_bytes)
    except Exception:
        cap = 64 * 1024 * 1024          # conservative (v7x-sized) fallback
    return max(32 * 1024 * 1024, cap - 8 * 1024 * 1024)


def _dense_gelu_ln(x, w1, b1, gamma, beta, eps):
    """dense1 + exact GELU + LayerNorm; f32 math, single-pass LN statistics."""
    h = jnp.dot(x, w1, preferred_element_type=jnp.float32)
    h = h + b1.astype(jnp.float32)
    # exact GELU (torch.nn.GELU default): 0.5*x*(1+erf(x/sqrt(2)))
    h = 0.5 * h * (1.0 + lax.erf(h * jnp.float32(_INV_SQRT2)))
    # Fused LayerNorm stats: one pass over h (var = E[h^2] - mean^2).
    mean = jnp.mean(h, axis=-1, keepdims=True)
    mean_sq = jnp.mean(h * h, axis=-1, keepdims=True)
    var = jnp.maximum(mean_sq - mean * mean, 0.0)
    hn = (h - mean) * lax.rsqrt(var + jnp.float32(eps))
    return hn * gamma.astype(jnp.float32) + beta.astype(jnp.float32)


def _fp_kernel_resident(x_ref, w1_ref, b1_ref, gamma_ref, beta_ref,
                        w2_ref, b2_ref, o_ref, *, eps):
    """All parameters resident in VMEM; grid = (row_tiles,)."""
    hn = _dense_gelu_ln(x_ref[...], w1_ref[...], b1_ref[...],
                        gamma_ref[...], beta_ref[...], eps)
    out = jnp.dot(hn.astype(w2_ref.dtype), w2_ref[...],
                  preferred_element_type=jnp.float32)
    o_ref[...] = (out + b2_ref[...].astype(jnp.float32)).astype(o_ref.dtype)


def _fp_kernel_tiled(x_ref, w1_ref, b1_ref, gamma_ref, beta_ref,
                     w2_ref, b2_ref, o_ref, hn_ref, *, eps):
    """Column-tiled fallback; grid = (row_tiles, col_tiles), col axis innermost."""
    # Compute + cache the normalized activations ONCE per row tile, already cast
    # to W2's dtype, so j > 0 column tiles just re-read the narrow copy (no
    # per-tile f32 reload + cast).  Correct only because axis 1 is the innermost
    # sequentially-executed ("arbitrary") axis.
    @pl.when(pl.program_id(1) == 0)
    def _():
        hn = _dense_gelu_ln(x_ref[...], w1_ref[...], b1_ref[...],
                            gamma_ref[...], beta_ref[...], eps)
        hn_ref[...] = hn.astype(hn_ref.dtype)

    out = jnp.dot(hn_ref[...], w2_ref[...], preferred_element_type=jnp.float32)
    o_ref[...] = (out + b2_ref[...].astype(jnp.float32)).astype(o_ref.dtype)


def feature_predictor(x, w1, b1, gamma, beta, w2, b2, *,
                      eps=1e-5, tile_m=512, tile_n=512):
    """x: (batch, seq, d_model) -> (batch, seq, n_features)."""
    B, S, D = x.shape
    F = w2.shape[1]
    M = B * S

    itemsize = lambda a: jnp.dtype(a.dtype).itemsize
    sub = _min_sublane(x.dtype)
    F_pad = _round_up(F, 128)               # lane-dense output stores
    vmem_limit = _vmem_budget_bytes()
    usable = int(vmem_limit * 0.9)
    const_buf = 1 if _SINGLE_BUFFER_OK else 2

    # --- Row tiling: rebalance so the pad is at most ~one sublane group.
    n_row = max(1, _cdiv(M, tile_m))
    tm = min(_round_up(_cdiv(M, n_row), sub), _round_up(M, sub))

    # --- VMEM estimates (double-buffered x/out tiles, single-buffered constants,
    #     plus f32 temporaries for h / hn inside the kernel body).
    def resident_bytes(tm_):
        return (const_buf * (D * D * itemsize(w1) + D * F_pad * itemsize(w2)
                             + 3 * D * 4 + F_pad * itemsize(b2))
                + 2 * tm_ * D * itemsize(x)
                + 2 * tm_ * F_pad * itemsize(x)
                + 3 * tm_ * D * 4)

    def tiled_bytes(tm_, tn_):
        return (const_buf * (D * D * itemsize(w1) + 3 * D * 4)
                + 2 * (D * tn_ * itemsize(w2) + tn_ * itemsize(b2))
                + 2 * tm_ * D * itemsize(x)
                + 2 * tm_ * tn_ * itemsize(x)
                + tm_ * D * itemsize(w2)        # cached hn scratch (w2 dtype)
                + 3 * tm_ * D * 4)

    # Prefer a fully-resident W2 (DMAed from HBM exactly once); shrink the row
    # tile a couple of times before giving up on residency.
    use_resident = False
    tn = F_pad
    for cand in (tm,
                 max(sub, _round_up(max(tm // 2, 1), sub)),
                 max(sub, _round_up(max(tm // 4, 1), sub))):
        if resident_bytes(cand) <= usable:
            tm, use_resident = cand, True
            break

    if not use_resident:
        # Column-tiled fallback for very large d_model * n_features.
        tn = min(_round_up(tile_n, 128), F_pad)
        while tn > 128 and tiled_bytes(tm, tn) > usable:
            tn = _round_up(max(tn // 2, 128), 128)
        while tm > sub and tiled_bytes(tm, tn) > usable:
            tm = max(sub, _round_up(max(tm // 2, 1), sub))

    # v7x has 2 TensorCores: make sure the parallel (row) axis has >= 2 tiles
    # when there is enough work to split.  (No-op for tiny problems.)
    if _cdiv(M, tm) == 1 and M >= 256:
        tm = max(sub, _round_up(_cdiv(M, 2), sub))

    M_pad = tm * _cdiv(M, tm)
    F_out = tn * _cdiv(F_pad, tn)           # multiple of the column tile

    # --- Host-side prep (pads skipped whenever shapes already line up).
    x2d = x.reshape(M, D)
    if M_pad != M:
        x2d = jnp.pad(x2d, ((0, M_pad - M), (0, 0)))
    w2p = w2 if F_out == F else jnp.pad(w2, ((0, 0), (0, F_out - F)))
    b2p = b2 if F_out == F else jnp.pad(b2, ((0, F_out - F),))

    b1r, gr, br = b1.reshape(1, D), gamma.reshape(1, D), beta.reshape(1, D)
    b2r = b2p.reshape(1, F_out)

    if use_resident:
        grid = (M_pad // tm,)
        kernel = functools.partial(_fp_kernel_resident, eps=eps)
        in_specs = [
            pl.BlockSpec((tm, D), lambda i: (i, 0)),       # x row tile
            _const_spec((D, D), lambda i: (0, 0)),         # W1 (resident)
            _const_spec((1, D), lambda i: (0, 0)),         # b1
            _const_spec((1, D), lambda i: (0, 0)),         # gamma
            _const_spec((1, D), lambda i: (0, 0)),         # beta
            _const_spec((D, F_out), lambda i: (0, 0)),     # W2 (resident)
            _const_spec((1, F_out), lambda i: (0, 0)),     # b2
        ]
        out_specs = pl.BlockSpec((tm, F_out), lambda i: (i, 0))
        scratch_shapes = []
        dim_sem = ("parallel",)
    else:
        grid = (M_pad // tm, F_out // tn)
        kernel = functools.partial(_fp_kernel_tiled, eps=eps)
        in_specs = [
            pl.BlockSpec((tm, D), lambda i, j: (i, 0)),    # x row tile
            _const_spec((D, D), lambda i, j: (0, 0)),      # W1 (resident)
            _const_spec((1, D), lambda i, j: (0, 0)),      # b1
            _const_spec((1, D), lambda i, j: (0, 0)),      # gamma
            _const_spec((1, D), lambda i, j: (0, 0)),      # beta
            pl.BlockSpec((D, tn), lambda i, j: (0, j)),    # W2 column tile
            pl.BlockSpec((1, tn), lambda i, j: (0, j)),    # b2 column tile
        ]
        out_specs = pl.BlockSpec((tm, tn), lambda i, j: (i, j))
        scratch_shapes = [pltpu.VMEM((tm, D), w2.dtype)]   # cached (casted) hn
        dim_sem = ("parallel", "arbitrary")

    out2d = pl.pallas_call(
        kernel,
        out_shape=jax.ShapeDtypeStruct((M_pad, F_out), x.dtype),
        grid_spec=pltpu.PrefetchScalarGridSpec(
            num_scalar_prefetch=0,
            grid=grid,
            in_specs=in_specs,
            out_specs=out_specs,
            scratch_shapes=scratch_shapes,
        ),
        compiler_params=pltpu.CompilerParams(
            dimension_semantics=dim_sem,
            vmem_limit_bytes=vmem_limit,
        ),
    )(x2d, w1, b1r, gr, br, w2p, b2r)

    return out2d[:M, :F].reshape(B, S, F)


def _reference(x, w1, b1, gamma, beta, w2, b2, eps=1e-5):
    h = x @ w1 + b1
    h = 0.5 * h * (1.0 + lax.erf(h / jnp.sqrt(2.0)))
    mean = jnp.mean(h, axis=-1, keepdims=True)
    var = jnp.mean((h - mean) ** 2, axis=-1, keepdims=True)
    hn = (h - mean) * lax.rsqrt(var + eps)
    hn = hn * gamma + beta
    return hn @ w2 + b2


if __name__ == "__main__":
    batch, seq, d_model, n_features = 2, 8, 32, 16

    key = jax.random.PRNGKey(0)
    kx, kw1, kb1, kg, kbe, kw2, kb2 = jax.random.split(key, 7)

    x = jax.random.normal(kx, (batch, seq, d_model), dtype=jnp.float32)

    # Deterministic synthetic parameters (shapes match nn.Linear / nn.LayerNorm).
    w1 = jax.random.normal(kw1, (d_model, d_model), dtype=jnp.float32) * 0.1
    b1 = jax.random.normal(kb1, (d_model,), dtype=jnp.float32) * 0.1
    gamma = 1.0 + 0.1 * jax.random.normal(kg, (d_model,), dtype=jnp.float32)
    beta = 0.1 * jax.random.normal(kbe, (d_model,), dtype=jnp.float32)
    w2 = jax.random.normal(kw2, (d_model, n_features), dtype=jnp.float32) * 0.1
    b2 = jax.random.normal(kb2, (n_features,), dtype=jnp.float32) * 0.1

    out = feature_predictor(x, w1, b1, gamma, beta, w2, b2)
    out = jax.block_until_ready(out)

    ref = _reference(x, w1, b1, gamma, beta, w2, b2)
    assert out.shape == (batch, seq, n_features)
    assert jnp.allclose(out, ref, atol=2e-4, rtol=2e-4), "mismatch vs reference"

    print("KERNEL_OK")
</pallas_src>

<mosaic_0001>
module attributes {stable_mosaic.version = 11 : i64} {
  func.func @_fp_kernel_resident(%arg0: i32, %arg1: memref<16x32xf32, #tpu.memory_space<vmem>>, %arg2: memref<32x32xf32, #tpu.memory_space<vmem>>, %arg3: memref<1x32xf32, #tpu.memory_space<vmem>>, %arg4: memref<1x32xf32, #tpu.memory_space<vmem>>, %arg5: memref<1x32xf32, #tpu.memory_space<vmem>>, %arg6: memref<32x128xf32, #tpu.memory_space<vmem>>, %arg7: memref<1x128xf32, #tpu.memory_space<vmem>>, %arg8: memref<16x128xf32, #tpu.memory_space<vmem>>) attributes {dimension_semantics = [#tpu.dimension_semantics<parallel>], iteration_bounds = array<i64: 1>, scalar_prefetch = 0 : i64, scratch_operands = 0 : i64, tpu.core_type = #tpu.core_type<tc>, window_params = [{transform_indices = @transform_0, window_bounds = array<i64: 16, 32>}, {pipeline_mode = #tpu.pipeline_mode<synchronous>, transform_indices = @transform_1, window_bounds = array<i64: 32, 32>}, {pipeline_mode = #tpu.pipeline_mode<synchronous>, transform_indices = @transform_2, window_bounds = array<i64: 1, 32>}, {pipeline_mode = #tpu.pipeline_mode<synchronous>, transform_indices = @transform_3, window_bounds = array<i64: 1, 32>}, {pipeline_mode = #tpu.pipeline_mode<synchronous>, transform_indices = @transform_4, window_bounds = array<i64: 1, 32>}, {pipeline_mode = #tpu.pipeline_mode<synchronous>, transform_indices = @transform_5, window_bounds = array<i64: 32, 128>}, {pipeline_mode = #tpu.pipeline_mode<synchronous>, transform_indices = @transform_6, window_bounds = array<i64: 1, 128>}, {transform_indices = @transform_7, window_bounds = array<i64: 16, 128>}]} {
    %c0 = arith.constant 0 : index
    %c0_0 = arith.constant 0 : index
    %0 = vector.load %arg1[%c0, %c0_0] : memref<16x32xf32, #tpu.memory_space<vmem>>, vector<16x32xf32>
    %c0_1 = arith.constant 0 : index
    %c0_2 = arith.constant 0 : index
    %1 = vector.load %arg2[%c0_1, %c0_2] : memref<32x32xf32, #tpu.memory_space<vmem>>, vector<32x32xf32>
    %c0_3 = arith.constant 0 : index
    %c0_4 = arith.constant 0 : index
    %2 = vector.load %arg3[%c0_3, %c0_4] : memref<1x32xf32, #tpu.memory_space<vmem>>, vector<1x32xf32>
    %c0_5 = arith.constant 0 : index
    %c0_6 = arith.constant 0 : index
    %3 = vector.load %arg4[%c0_5, %c0_6] : memref<1x32xf32, #tpu.memory_space<vmem>>, vector<1x32xf32>
    %c0_7 = arith.constant 0 : index
    %c0_8 = arith.constant 0 : index
    %4 = vector.load %arg5[%c0_7, %c0_8] : memref<1x32xf32, #tpu.memory_space<vmem>>, vector<1x32xf32>
    %cst = arith.constant dense<0.000000e+00> : vector<16x32xf32>
    %5 = tpu.matmul %0, %1, %cst {dimension_numbers = #tpu.dot_dimension_numbers<[1], [0], [0], [1], [0, 0, 1, 1], [], []>} : vector<16x32xf32>, vector<32x32xf32>, vector<16x32xf32> -> vector<16x32xf32>
    %6 = vector.broadcast %2 : vector<1x32xf32> to vector<16x32xf32>
    %7 = arith.addf %5, %6 : vector<16x32xf32>
    %cst_9 = arith.constant 5.000000e-01 : f32
    %8 = vector.broadcast %cst_9 : f32 to vector<16x32xf32>
    %9 = arith.mulf %8, %7 : vector<16x32xf32>
    %cst_10 = arith.constant 0.707106769 : f32
    %10 = vector.broadcast %cst_10 : f32 to vector<16x32xf32>
    %11 = arith.mulf %7, %10 : vector<16x32xf32>
    %12 = math.erf %11 : vector<16x32xf32>
    %cst_11 = arith.constant 1.000000e+00 : f32
    %13 = vector.broadcast %cst_11 : f32 to vector<16x32xf32>
    %14 = arith.addf %13, %12 : vector<16x32xf32>
    %15 = arith.mulf %9, %14 : vector<16x32xf32>
    %cst_12 = arith.constant dense<0.000000e+00> : vector<16xf32>
    %16 = vector.multi_reduction <add>, %15, %cst_12 [1] : vector<16x32xf32> to vector<16xf32>
    %17 = vector.shape_cast %16 : vector<16xf32> to vector<16x1xf32>
    %cst_13 = arith.constant 3.200000e+01 : f32
    %18 = vector.broadcast %cst_13 : f32 to vector<16x1xf32>
    %19 = arith.divf %17, %18 : vector<16x1xf32>
    %20 = arith.mulf %15, %15 : vector<16x32xf32>
    %cst_14 = arith.constant dense<0.000000e+00> : vector<16xf32>
    %21 = vector.multi_reduction <add>, %20, %cst_14 [1] : vector<16x32xf32> to vector<16xf32>
    %22 = vector.shape_cast %21 : vector<16xf32> to vector<16x1xf32>
    %cst_15 = arith.constant 3.200000e+01 : f32
    %23 = vector.broadcast %cst_15 : f32 to vector<16x1xf32>
    %24 = arith.divf %22, %23 : vector<16x1xf32>
    %25 = arith.mulf %19, %19 : vector<16x1xf32>
    %26 = arith.subf %24, %25 : vector<16x1xf32>
    %cst_16 = arith.constant 0.000000e+00 : f32
    %27 = vector.broadcast %cst_16 : f32 to vector<16x1xf32>
    %28 = arith.maximumf %26, %27 : vector<16x1xf32>
    %29 = vector.broadcast %19 : vector<16x1xf32> to vector<16x32xf32>
    %30 = arith.subf %15, %29 : vector<16x32xf32>
    %cst_17 = arith.constant 9.99999974E-6 : f32
    %31 = vector.broadcast %cst_17 : f32 to vector<16x1xf32>
    %32 = arith.addf %28, %31 : vector<16x1xf32>
    %33 = math.rsqrt %32 : vector<16x1xf32>
    %34 = vector.broadcast %33 : vector<16x1xf32> to vector<16x32xf32>
    %35 = arith.mulf %30, %34 : vector<16x32xf32>
    %36 = vector.broadcast %3 : vector<1x32xf32> to vector<16x32xf32>
    %37 = arith.mulf %35, %36 : vector<16x32xf32>
    %38 = vector.broadcast %4 : vector<1x32xf32> to vector<16x32xf32>
    %39 = arith.addf %37, %38 : vector<16x32xf32>
    %c0_18 = arith.constant 0 : index
    %c0_19 = arith.constant 0 : index
    %40 = vector.load %arg6[%c0_18, %c0_19] : memref<32x128xf32, #tpu.memory_space<vmem>>, vector<32x128xf32>
    %cst_20 = arith.constant dense<0.000000e+00> : vector<16x128xf32>
    %41 = tpu.matmul %39, %40, %cst_20 {dimension_numbers = #tpu.dot_dimension_numbers<[1], [0], [0], [1], [0, 0, 1, 1], [], []>} : vector<16x32xf32>, vector<32x128xf32>, vector<16x128xf32> -> vector<16x128xf32>
    %c0_21 = arith.constant 0 : index
    %c0_22 = arith.constant 0 : index
    %42 = vector.load %arg7[%c0_21, %c0_22] : memref<1x128xf32, #tpu.memory_space<vmem>>, vector<1x128xf32>
    %43 = vector.broadcast %42 : vector<1x128xf32> to vector<16x128xf32>
    %44 = arith.addf %41, %43 : vector<16x128xf32>
    %c0_23 = arith.constant 0 : index
    %c0_24 = arith.constant 0 : index
    %45 = vector.load %arg8[%c0_23, %c0_24] : memref<16x128xf32, #tpu.memory_space<vmem>>, vector<16x128xf32>
    tpu.vector_store %arg8[%c0_23, %c0_24], %44 {strides = array<i32>} : memref<16x128xf32, #tpu.memory_space<vmem>>, vector<16x128xf32>,
    return
  }
  func.func @transform_0(%arg0: i32) -> (i32, i32) {
    %c0_i32 = arith.constant 0 : i32
    %c0_i32_0 = arith.constant 0 : i32
    return %arg0, %c0_i32 : i32, i32
  }
  func.func @transform_1(%arg0: i32) -> (i32, i32) {
    %c0_i32 = arith.constant 0 : i32
    %c0_i32_0 = arith.constant 0 : i32
    %c0_i32_1 = arith.constant 0 : i32
    return %c0_i32, %c0_i32_0 : i32, i32
  }
  func.func @transform_2(%arg0: i32) -> (i32, i32) {
    %c0_i32 = arith.constant 0 : i32
    %c0_i32_0 = arith.constant 0 : i32
    %c0_i32_1 = arith.constant 0 : i32
    return %c0_i32, %c0_i32_0 : i32, i32
  }
  func.func @transform_3(%arg0: i32) -> (i32, i32) {
    %c0_i32 = arith.constant 0 : i32
    %c0_i32_0 = arith.constant 0 : i32
    %c0_i32_1 = arith.constant 0 : i32
    return %c0_i32, %c0_i32_0 : i32, i32
  }
  func.func @transform_4(%arg0: i32) -> (i32, i32) {
    %c0_i32 = arith.constant 0 : i32
    %c0_i32_0 = arith.constant 0 : i32
    %c0_i32_1 = arith.constant 0 : i32
    return %c0_i32, %c0_i32_0 : i32, i32
  }
  func.func @transform_5(%arg0: i32) -> (i32, i32) {
    %c0_i32 = arith.constant 0 : i32
    %c0_i32_0 = arith.constant 0 : i32
    %c0_i32_1 = arith.constant 0 : i32
    return %c0_i32, %c0_i32_0 : i32, i32
  }
  func.func @transform_6(%arg0: i32) -> (i32, i32) {
    %c0_i32 = arith.constant 0 : i32
    %c0_i32_0 = arith.constant 0 : i32
    %c0_i32_1 = arith.constant 0 : i32
    return %c0_i32, %c0_i32_0 : i32, i32
  }
  func.func @transform_7(%arg0: i32) -> (i32, i32) {
    %c0_i32 = arith.constant 0 : i32
    %c0_i32_0 = arith.constant 0 : i32
    return %arg0, %c0_i32 : i32, i32
  }
}

</mosaic_0001>

<llo_original>
// kernel: tpu_custom_call.1
$region0: #{tpu_custom_call.1}
  #allocation0 [shape = 'u32[]', space=smem, size = 0x4, offset = 0x4, fixed_abs, tag = 'smem constant byte address 0x4 - core index']
  #allocation1 [shape = 'u32[144,128]{1,0:T(1,128)}', space=vmem, size = 0x12000, scoped, tag = 'internal scratch']
  %s0 = inlined_call_operand.hbm [shape: f32[16,32], index: 0, kind: input, shape index: {}]
  %s1 = inlined_call_operand.hbm [shape: f32[32,32], index: 1, kind: input, shape index: {}]
  %s2 = inlined_call_operand.vmem [shape: f32[1,32], index: 2, kind: input, shape index: {}]
  %s3 = inlined_call_operand.vmem [shape: f32[1,32], index: 3, kind: input, shape index: {}]
  %s4 = inlined_call_operand.vmem [shape: f32[1,32], index: 4, kind: input, shape index: {}]
  %s5 = inlined_call_operand.hbm [shape: f32[32,128], index: 5, kind: input, shape index: {}]
  %s6 = inlined_call_operand.vmem [shape: f32[1,128], index: 6, kind: input, shape index: {}]
  %s7 = inlined_call_operand.hbm [shape: f32[16,128], index: 7, kind: output, shape index: {}]
  %s8 = sld [smem:[#allocation0]]
  $region50: #{tpu_custom_call.1} parent=0
    _
  %s10 = ssub.s32 1, %s8
  %s11 = scalar_select 0, %s10, %s8
  $region1: #{tpu_custom_call.1} parent=0
    #allocation2 [shape = 'u8[8192]{0}', space=vmem, size = 0x2000, scoped, tag = 'input window, operand 0, single buffered']
    #allocation3 [shape = 's32[1]{0}', space=sflag, size = 0x4, scoped, tag = 'scoped memory for tpu_custom_call.1']
    #allocation4 [shape = 's32[1]{0}', space=sflag, size = 0x4, scoped, tag = 'scoped memory for tpu_custom_call.1']
    #allocation5 [shape = 'u8[16384]{0}', space=vmem, size = 0x4000, scoped, tag = 'input window, operand 1, single buffered']
    #allocation6 [shape = 's32[1]{0}', space=sflag, size = 0x4, scoped, tag = 'scoped memory for tpu_custom_call.1']
    #allocation7 [shape = 'u8[16384]{0}', space=vmem, size = 0x4000, scoped, tag = 'input window, operand 5, single buffered']
    #allocation8 [shape = 'u8[8192]{0}', space=vmem, size = 0x2000, scoped, tag = 'output window, operand 0, single buffered']
    %12 = vsyncpa [#allocation3], 0
    %13 = vsyncpa [#allocation6], 0
    %14 = vsyncpa [#allocation4], 0
    // Predicated region
    $region2: #{tpu_custom_call.1} parent=1 // pred_check
      _
    $region3: #{tpu_custom_call.1} parent=1 // pred_check_branch
      %16 = sbr.rel (0) target = $region5
    $region4: #{tpu_custom_call.1} parent=1 // pred_region
      %s18 = ssub.s32 256, 256
      %19 = vsyncadd [#allocation3], %s18
      %s20 = sshll.u32 [#allocation2], 4
      %s21 = int_to_ptr.vmem [resolvable:$true] %s20
      %26 = dma.hbm_to_vmem [thread:$0]  %s0, 256, %s21, [#allocation3], 128, 128, 8
    $region5: #{tpu_custom_call.1} parent=1 // pred_fallthru
      _
    // Predicated region
    $region6: #{tpu_custom_call.1} parent=1 // pred_check
      _
    $region7: #{tpu_custom_call.1} parent=1 // pred_check_branch
      %28 = sbr.rel (0) target = $region9
    $region8: #{tpu_custom_call.1} parent=1 // pred_region
      %s30 = ssub.s32 512, 512
      %31 = vsyncadd [#allocation6], %s30
      %s32 = sshll.u32 [#allocation5], 4
      %s33 = int_to_ptr.vmem [resolvable:$true] %s32
      %38 = dma.hbm_to_vmem [thread:$0]  %s1, 512, %s33, [#allocation6], 128, 128, 8
    $region9: #{tpu_custom_call.1} parent=1 // pred_fallthru
      _
    // Predicated region
    $region10: #{tpu_custom_call.1} parent=1 // pred_check
      _
    $region11: #{tpu_custom_call.1} parent=1 // pred_check_branch
      %40 = sbr.rel (0) target = $region13
    $region12: #{tpu_custom_call.1} parent=1 // pred_region
      _
    $region13: #{tpu_custom_call.1} parent=1 // pred_fallthru
      _
    // Predicated region
    $region14: #{tpu_custom_call.1} parent=1 // pred_check
      _
    $region15: #{tpu_custom_call.1} parent=1 // pred_check_branch
      %42 = sbr.rel (0) target = $region17
    $region16: #{tpu_custom_call.1} parent=1 // pred_region
      _
    $region17: #{tpu_custom_call.1} parent=1 // pred_fallthru
      _
    // Predicated region
    $region18: #{tpu_custom_call.1} parent=1 // pred_check
      _
    $region19: #{tpu_custom_call.1} parent=1 // pred_check_branch
      %44 = sbr.rel (0) target = $region21
    $region20: #{tpu_custom_call.1} parent=1 // pred_region
      _
    $region21: #{tpu_custom_call.1} parent=1 // pred_fallthru
      _
    // Predicated region
    $region22: #{tpu_custom_call.1} parent=1 // pred_check
      _
    $region23: #{tpu_custom_call.1} parent=1 // pred_check_branch
      %46 = sbr.rel (0) target = $region25
    $region24: #{tpu_custom_call.1} parent=1 // pred_region
      %s48 = ssub.s32 512, 512
      %49 = vsyncadd [#allocation6], %s48
      %s50 = sshll.u32 [#allocation7], 4
      %s51 = int_to_ptr.vmem [resolvable:$true] %s50
      %56 = dma.hbm_to_vmem [thread:$0]  %s5, 512, %s51, [#allocation6], 128, 128, 8
    $region25: #{tpu_custom_call.1} parent=1 // pred_fallthru
      _
    // Predicated region
    $region26: #{tpu_custom_call.1} parent=1 // pred_check
      _
    $region27: #{tpu_custom_call.1} parent=1 // pred_check_branch
      %58 = sbr.rel (0) target = $region29
    $region28: #{tpu_custom_call.1} parent=1 // pred_region
      _
    $region29: #{tpu_custom_call.1} parent=1 // pred_fallthru
      _
    // Predicated region
    $region30: #{tpu_custom_call.1} parent=1 // pred_check
      _
    $region31: #{tpu_custom_call.1} parent=1 // pred_check_branch
      %60 = sbr.rel (0) target = $region33
    $region32: #{tpu_custom_call.1} parent=1 // pred_region
      %61 = dma.done [#allocation3], 256
    $region33: #{tpu_custom_call.1} parent=1 // pred_fallthru
      _
    // Predicated region
    $region34: #{tpu_custom_call.1} parent=1 // pred_check
      _
    $region35: #{tpu_custom_call.1} parent=1 // pred_check_branch
      %63 = sbr.rel (0) target = $region37
    $region36: #{tpu_custom_call.1} parent=1 // pred_region
      %64 = dma.done [#allocation6], 512
    $region37: #{tpu_custom_call.1} parent=1 // pred_fallthru
      _
    // Predicated region
    $region38: #{tpu_custom_call.1} parent=1 // pred_check
      _
    $region39: #{tpu_custom_call.1} parent=1 // pred_check_branch
      %66 = sbr.rel (0) target = $region41
    $region40: #{tpu_custom_call.1} parent=1 // pred_region
      %67 = dma.done [#allocation6], 512
    $region41: #{tpu_custom_call.1} parent=1 // pred_fallthru
      _
    %v68 = vld [vmem:[#allocation2] sm:$0xff]
    %v69 = vld [vmem:[#allocation2 + $0x8] sm:$0xff]
    %v70 = vld [vmem:[#allocation5] sm:$0xff]
    %v71 = vld [vmem:[#allocation5 + $0x8] sm:$0xff]
    %v72 = vld [vmem:[#allocation5 + $0x10] sm:$0xff]
    %v73 = vld [vmem:[#allocation5 + $0x18] sm:$0xff]
    %v74 = vld [vmem:[%s2] sm:$0x1]
    %v75 = vld [vmem:[%s3] sm:$0x1]
    %v76 = vld [vmem:[%s4] sm:$0x1]
    %v78 = vlaneseq
    %v79 = vshrl.u32 %v78, 7
    %v80 = vsub.s32 0, %v79
    %v81 = vrot.slane %v74, %v80
    %vm83 = vcmask 261120
    %v85 = vsel %vm83, %v68, 0
    %v88 = vsel %vm83, %v69, 0
    %90 = vmatprep.subr.mxu0 0.0
    %91 = vmatpush1.msra.mxu0 %v70
    %92 = vmatprep.subr.mxu0 0.0
    %93 = vmatpush1.msra.mxu0 %v71
    %94 = vmatprep.subr.mxu0 0.0
    %95 = vmatpush1.msra.mxu0 %v72
    %96 = vmatprep.subr.mxu0 0.0
    %97 = vmatpush1.msra.mxu0 %v73
    %98 = vmatprep.subr.mxu0 0.0
    %99 = vmatpush1.msra.mxu0 0.0
    %100 = vmatprep.subr.mxu0 0.0
    %101 = vmatpush1.msra.mxu0 0.0
    %102 = vmatprep.subr.mxu0 0.0
    %103 = vmatpush1.msra.mxu0 0.0
    %104 = vmatprep.subr.mxu0 0.0
    %105 = vmatpush1.msra.mxu0 0.0
    %106 = vmatprep.subr.mxu0 0.0
    %107 = vmatpush1.msra.mxu0 0.0
    %108 = vmatprep.subr.mxu0 0.0
    %109 = vmatpush1.msra.mxu0 0.0
    %110 = vmatprep.subr.mxu0 0.0
    %111 = vmatpush1.msra.mxu0 0.0
    %112 = vmatprep.subr.mxu0 0.0
    %113 = vmatpush1.msra.mxu0 0.0
    %114 = vmatprep.subr.mxu0 0.0
    %115 = vmatpush1.msra.mxu0 0.0
    %116 = vmatprep.subr.mxu0 0.0
    %117 = vmatpush1.msra.mxu0 0.0
    %118 = vmatprep.subr.mxu0 0.0
    %119 = vmatpush1.msra.mxu0 0.0
    %120 = vmatprep.subr.mxu0 0.0
    %121 = vmatpush1.msra.mxu0 0.0
    %122 = vmatprep.subr.mxu0 0.0
    %123 = vmatpush1.msra.mxu0 0.0
    %124 = vmatprep.subr.mxu0 0.0
    %125 = vmatpush1.msra.mxu0 0.0
    %126 = vmatprep.subr.mxu0 0.0
    %127 = vmatpush1.msra.mxu0 0.0
    %128 = vmatprep.subr.mxu0 0.0
    %129 = vmatpush1.msra.mxu0 0.0
    %130 = vmatprep.subr.mxu0 0.0
    %131 = vmatpush1.msra.mxu0 0.0
    %132 = vmatprep.subr.mxu0 0.0
    %133 = vmatpush1.msra.mxu0 0.0
    %134 = vmatprep.subr.mxu0 0.0
    %135 = vmatpush1.msra.mxu0 0.0
    %136 = vmatprep.subr.mxu0 0.0
    %137 = vmatpush1.msra.mxu0 0.0
    %138 = vmatprep.subr.mxu0 0.0
    %139 = vmatpush1.msra.mxu0 0.0
    %140 = vmatprep.subr.mxu0 0.0
    %141 = vmatpush1.msra.mxu0 0.0
    %142 = vmatprep.subr.mxu0 0.0
    %143 = vmatpush1.msra.mxu0 0.0
    %144 = vmatprep.subr.mxu0 0.0
    %145 = vmatpush1.msra.mxu0 0.0
    %146 = vmatprep.subr.mxu0 0.0
    %147 = vmatpush1.msra.mxu0 0.0
    %148 = vmatprep.subr.mxu0 0.0
    %149 = vmatpush1.msra.mxu0 0.0
    %150 = vmatprep.subr.mxu0 0.0
    %151 = vmatpush1.msra.mxu0 0.0
    %152 = vmatprep.subr.mxu0 0.0
    %153 = vmatpush1.msra.mxu0 0.0
    %154 = vmatprep.mubr.f32.mxu0 0.0
    %155 = vmatmul.mubr.f32.gmra.mrb[0].mxu0 %v85
    %v156 = vpop.f32.mrb[0].mxu0
    %v157 = vadd.f32 %v81, %v156
    %v158 = vpop.f32.mrb[0].mxu0
    %159 = vmatprep.mubr.f32.mxu0 0.0
    %160 = vmatmul.mubr.f32.gmra.mrb[0].mxu0 %v88
    %v161 = vpop.f32.mrb[0].mxu0
    %v162 = vadd.f32 %v81, %v161
    %v163 = vpop.f32.mrb[0].mxu0
    %164 = vdwg.mxu0
    %v165 = vmul.f32 %v157, 0.5
    %v166 = vmul.f32 %v162, 0.5
    %v167 = vmul.f32 %v157, 0.70710677
    %v168 = vmul.f32 %v162, 0.70710677
    %v169 = verf.f32.pop %v167
    %v170 = verf.f32.pop %v168
    %v171 = vadd.f32 %v169, 1.0
    %v172 = vadd.f32 %v170, 1.0
    %v173 = vmul.f32 %v165, %v171
    %v174 = vmul.f32 %v166, %v172
    %v175 = vsel %vm83, %v173, 0.0
    %176 = vadd.xlane.f32.xlu0 %v175
    %v177 = vpop.xlane.xlu0 %176
    %v178 = vsel %vm83, %v174, 0.0
    %179 = vadd.xlane.f32.xlu0 %v178
    %v180 = vpop.xlane.xlu0 %179
    %v181 = vrcp.pop 32.0
    %v182 = vmul.f32 %v177, %v181
    %v183 = vmul.f32 %v180, %v181
    %v184 = vmul.f32 %v173, %v173
    %v185 = vmul.f32 %v174, %v174
    %v186 = vsel %vm83, %v184, 0.0
    %187 = vadd.xlane.f32.xlu0 %v186
    %v188 = vpop.xlane.xlu0 %187
    %v189 = vsel %vm83, %v185, 0.0
    %190 = vadd.xlane.f32.xlu0 %v189
    %v191 = vpop.xlane.xlu0 %190
    %v192 = vmul.f32 %v188, %v181
    %v193 = vmul.f32 %v191, %v181
    %v194 = vmul.f32 %v182, %v182
    %v195 = vmul.f32 %v183, %v183
    %v196 = vsub.f32 %v192, %v194
    %v197 = vsub.f32 %v193, %v195
    %v198 = vmax.f32 %v196, 0.0
    %v199 = vmax.f32 %v197, 0.0
    %v200 = vsub.f32 %v173, %v182
    %v201 = vsub.f32 %v174, %v183
    %v202 = vadd.f32 %v198, 1e-05
    %v203 = vadd.f32 %v199, 1e-05
    %v204 = vrsqrt.pop %v202
    %v205 = vrsqrt.pop %v203
    %v206 = vmul.f32 %v200, %v204
    %v207 = vmul.f32 %v201, %v205
    %v209 = vlaneseq
    %v210 = vshrl.u32 %v209, 7
    %v211 = vsub.s32 0, %v210
    %v212 = vrot.slane %v75, %v211
    %v214 = vmul.f32 %v206, %v212
    %v215 = vmul.f32 %v207, %v212
    %v217 = vlaneseq
    %v218 = vshrl.u32 %v217, 7
    %v219 = vsub.s32 0, %v218
    %v220 = vrot.slane %v76, %v219
    %v222 = vadd.f32 %v214, %v220
    %v223 = vadd.f32 %v215, %v220
    %v224 = vld [vmem:[#allocation7] sm:$0xff]
    %v225 = vld [vmem:[#allocation7 + $0x8] sm:$0xff]
    %v226 = vld [vmem:[#allocation7 + $0x10] sm:$0xff]
    %v227 = vld [vmem:[#allocation7 + $0x18] sm:$0xff]
    %v228 = vld [vmem:[%s6] sm:$0x1]
    %v230 = vlaneseq
    %v231 = vshrl.u32 %v230, 7
    %v232 = vsub.s32 0, %v231
    %v233 = vrot.slane %v228, %v232
    %v236 = vsel %vm83, %v222, 0
    %v239 = vsel %vm83, %v223, 0
    %241 = vmatprep.subr.mxu0 0.0
    %242 = vmatpush1.msra.mxu0 %v224
    %243 = vmatprep.subr.mxu0 0.0
    %244 = vmatpush1.msra.mxu0 %v225
    %245 = vmatprep.subr.mxu0 0.0
    %246 = vmatpush1.msra.mxu0 %v226
    %247 = vmatprep.subr.mxu0 0.0
    %248 = vmatpush1.msra.mxu0 %v227
    %249 = vmatprep.subr.mxu0 0.0
    %250 = vmatpush1.msra.mxu0 0.0
    %251 = vmatprep.subr.mxu0 0.0
    %252 = vmatpush1.msra.mxu0 0.0
    %253 = vmatprep.subr.mxu0 0.0
    %254 = vmatpush1.msra.mxu0 0.0
    %255 = vmatprep.subr.mxu0 0.0
    %256 = vmatpush1.msra.mxu0 0.0
    %257 = vmatprep.subr.mxu0 0.0
    %258 = vmatpush1.msra.mxu0 0.0
    %259 = vmatprep.subr.mxu0 0.0
    %260 = vmatpush1.msra.mxu0 0.0
    %261 = vmatprep.subr.mxu0 0.0
    %262 = vmatpush1.msra.mxu0 0.0
    %263 = vmatprep.subr.mxu0 0.0
    %264 = vmatpush1.msra.mxu0 0.0
    %265 = vmatprep.subr.mxu0 0.0
    %266 = vmatpush1.msra.mxu0 0.0
    %267 = vmatprep.subr.mxu0 0.0
    %268 = vmatpush1.msra.mxu0 0.0
    %269 = vmatprep.subr.mxu0 0.0
    %270 = vmatpush1.msra.mxu0 0.0
    %271 = vmatprep.subr.mxu0 0.0
    %272 = vmatpush1.msra.mxu0 0.0
    %273 = vmatprep.subr.mxu0 0.0
    %274 = vmatpush1.msra.mxu0 0.0
    %275 = vmatprep.subr.mxu0 0.0
    %276 = vmatpush1.msra.mxu0 0.0
    %277 = vmatprep.subr.mxu0 0.0
    %278 = vmatpush1.msra.mxu0 0.0
    %279 = vmatprep.subr.mxu0 0.0
    %280 = vmatpush1.msra.mxu0 0.0
    %281 = vmatprep.subr.mxu0 0.0
    %282 = vmatpush1.msra.mxu0 0.0
    %283 = vmatprep.subr.mxu0 0.0
    %284 = vmatpush1.msra.mxu0 0.0
    %285 = vmatprep.subr.mxu0 0.0
    %286 = vmatpush1.msra.mxu0 0.0
    %287 = vmatprep.subr.mxu0 0.0
    %288 = vmatpush1.msra.mxu0 0.0
    %289 = vmatprep.subr.mxu0 0.0
    %290 = vmatpush1.msra.mxu0 0.0
    %291 = vmatprep.subr.mxu0 0.0
    %292 = vmatpush1.msra.mxu0 0.0
    %293 = vmatprep.subr.mxu0 0.0
    %294 = vmatpush1.msra.mxu0 0.0
    %295 = vmatprep.subr.mxu0 0.0
    %296 = vmatpush1.msra.mxu0 0.0
    %297 = vmatprep.subr.mxu0 0.0
    %298 = vmatpush1.msra.mxu0 0.0
    %299 = vmatprep.subr.mxu0 0.0
    %300 = vmatpush1.msra.mxu0 0.0
    %301 = vmatprep.subr.mxu0 0.0
    %302 = vmatpush1.msra.mxu0 0.0
    %303 = vmatprep.subr.mxu0 0.0
    %304 = vmatpush1.msra.mxu0 0.0
    %305 = vmatprep.mubr.f32.mxu0 0.0
    %306 = vmatmul.mubr.f32.gmra.mrb[0].mxu0 %v236
    %v307 = vpop.f32.mrb[0].mxu0
    %v308 = vadd.f32 %v233, %v307
    %v309 = vpop.f32.mrb[0].mxu0
    %310 = vmatprep.mubr.f32.mxu0 0.0
    %311 = vmatmul.mubr.f32.gmra.mrb[0].mxu0 %v239
    %v312 = vpop.f32.mrb[0].mxu0
    %v313 = vadd.f32 %v233, %v312
    %v314 = vpop.f32.mrb[0].mxu0
    %315 = vdwg.mxu0
    %316 = vst [vmem:[#allocation8] sm:$0xff] %v308
    %317 = vst [vmem:[#allocation8 + $0x8] sm:$0xff] %v313
    // Predicated region
    $region42: #{tpu_custom_call.1} parent=1 // pred_check
      _
    $region43: #{tpu_custom_call.1} parent=1 // pred_check_branch
      %319 = sbr.rel (0) target = $region45
    $region44: #{tpu_custom_call.1} parent=1 // pred_region
      %s321 = ssub.s32 256, 256
      %322 = vsyncadd [#allocation4], %s321
      %s323 = sshll.u32 [#allocation8], 4
      %s324 = int_to_ptr.vmem [resolvable:$true] %s323
      %329 = dma.vmem_to_hbm [thread:$0]  %s324, 256, %s7, [#allocation4], 128, 128, 8
    $region45: #{tpu_custom_call.1} parent=1 // pred_fallthru
      _
    // Predicated region
    $region46: #{tpu_custom_call.1} parent=1 // pred_check
      _
    $region47: #{tpu_custom_call.1} parent=1 // pred_check_branch
      %331 = sbr.rel (0) target = $region49
    $region48: #{tpu_custom_call.1} parent=1 // pred_region
      %332 = dma.done [#allocation4], 256
    $region49: #{tpu_custom_call.1} parent=1 // pred_fallthru
      _
    %333 = vsyncpa [#allocation3], 1
    %334 = vsyncpa [#allocation6], 1
    %335 = vsyncpa [#allocation4], 1

</llo_original>
